<compile_context>
chip_gen: v5e
topology: v5e:2x2
jax: 0.10.0
libtpu: 0.0.40
codegen_flags: <defaults>
</compile_context>

<pallas_src>
import functools
import math

import numpy as np
import jax
import jax.numpy as jnp
from jax import lax
from jax.experimental import pallas as pl
from jax.experimental.pallas import tpu as pltpu

_LANES = 128


def factorize(number, order):
    d = {(1, 3): [1, 1], (1, 4): [1, 1, 1], (3, 3): [1, 3], (3, 4): [1, 1, 3],
         (4, 3): [2, 2], (4, 4): [1, 2, 2], (8, 3): [2, 4], (8, 4): [2, 2, 2],
         (16, 3): [4, 4], (16, 4): [2, 2, 4], (32, 3): [4, 8], (32, 4): [2, 4, 4],
         (64, 3): [8, 8], (64, 4): [4, 4, 4], (128, 3): [8, 16], (128, 4): [4, 4, 8],
         (256, 3): [16, 16], (256, 4): [4, 8, 8], (512, 3): [16, 32],
         (512, 4): [8, 8, 8], (1024, 3): [32, 32], (1024, 4): [8, 8, 16]}
    return d[number, order]


def _round_up(x, m):
    return ((x + m - 1) // m) * m


# ----------------------- fast path: stride=1 "same" conv ----------------------

def _conv2d_same_kernel(x_ref, w_ref, m_ref, b_ref, o_ref, xp_ref, p_ref, *,
                        H, W, KH, KW, padding, dilation, C_in,
                        pad_lo, pad_hi, M, M_t, n_sp, compute_dtype):
    """One (batch, spatial-tile, Cout-tile) grid step.

    x_ref : (1, C_in, M)        NCHW input, spatial flattened, bf16 (lane-dense)
    w_ref : (TCO, K)            weight slab, bf16, columns ordered (kh, kw, cin)
    m_ref : (KH*KW, M_t)        0/1 boundary masks per tap, bf16
    b_ref : (TCO, 1)            bias column, f32
    o_ref : (1, TCO, M_t)       lane-dense output block
    xp_ref: (C_in, pad_lo+M+pad_hi)   persistent halo-padded activations (scratch)
    p_ref : (K, M_t)            persistent bf16 im2col slab (scratch)
    """
    s = pl.program_id(1)
    c = pl.program_id(2)

    # Halo-padded activations: built once per batch element (the x block and
    # this scratch are constant across the spatial / Cout-tile axes, which are
    # both "arbitrary" = sequential).  VMEM-only, never round-trips to HBM.
    @pl.when(jnp.logical_and(s == 0, c == 0))
    def _():
        parts = []
        if pad_lo:
            parts.append(jnp.zeros((C_in, pad_lo), compute_dtype))
        parts.append(x_ref[0])
        if pad_hi:
            parts.append(jnp.zeros((C_in, pad_hi), compute_dtype))
        xp_ref[...] = (jnp.concatenate(parts, axis=1)
                       if len(parts) > 1 else parts[0])

    # im2col slab: built once per spatial tile, reused for all Cout tiles
    # (scratch persists across grid iterations; Cout is the innermost axis).
    @pl.when(c == 0)
    def _():
        if n_sp == 1:
            win = xp_ref[...]                       # static full read
        else:
            # Lane-aligned dynamic window covering every tap of this tile.
            base = pl.multiple_of(s * M_t, _LANES)  # M_t % 128 == 0 here
            win = xp_ref[:, pl.ds(base, pad_lo + M_t + pad_hi)]

        masks = m_ref[...]                          # (KH*KW, M_t) bf16, 0/1
        aligned = (C_in % 8 == 0)
        taps = []
        for kh in range(KH):
            for kw in range(KW):
                t = kh * KW + kw
                shift = (kh * dilation - padding) * W + (kw * dilation - padding)
                off = pad_lo + shift                # static, >= 0
                # tap value for output pixel j is x_flat[j + shift]; the mask
                # zeroes lanes whose 2D source falls outside the HxW image.
                tap = win[:, off:off + M_t] * masks[t:t + 1, :]
                if aligned:
                    # Sublane-aligned direct store into the bf16 scratch: no
                    # f32 slab, no extra K x M copy.
                    p_ref[t * C_in:(t + 1) * C_in, :] = tap
                else:
                    taps.append(tap)
        if not aligned:
            # Tiny C_in (< 8): build the slab in registers and store once.
            p_ref[...] = jnp.stack(taps, axis=0).reshape(KH * KW * C_in, M_t)

    # Single fused MXU contraction over K = KH*KW*C_in, f32 accumulation.
    acc = jnp.dot(w_ref[...], p_ref[...], preferred_element_type=jnp.float32)
    acc = acc + b_ref[...]                          # (TCO, 1) lane broadcast
    o_ref[0] = acc.astype(o_ref.dtype)


def _tap_masks(H, W, KH, KW, padding, dilation, dtype):
    """Static 0/1 masks, one row per kernel tap, marking flat output positions
    whose shifted source pixel lies inside the un-padded HxW image."""
    r = np.arange(H * W) // W
    c = np.arange(H * W) % W
    rows = []
    for kh in range(KH):
        for kw in range(KW):
            sh = kh * dilation - padding
            sw = kw * dilation - padding
            rows.append(((r + sh >= 0) & (r + sh < H) &
                         (c + sw >= 0) & (c + sw < W)).astype(np.float32))
    return jnp.asarray(np.stack(rows, axis=0), dtype=dtype)   # (KH*KW, H*W)


def _choose_cout_tile(C_out):
    # 256 matches the v6e/v7x 2x256^2 MXU; 128 avoids one huge un-tiled weight
    # block for C_out that is a multiple of 128 but not of 256.
    # TODO(synk): on v5e (4x128^2 MXU, 16 MiB scoped VMEM) prefer 128 always.
    for t in (256, 128):
        if C_out % t == 0:
            return t
    return C_out


def _choose_spatial_tile(M, K, tco, out_bytes, budget=8 << 20):
    """Largest lane-aligned divisor of M whose per-tile VMEM footprint
    (bf16 im2col slab + f32 acc + double-buffered output block) fits budget."""
    if M % _LANES != 0:
        return M                      # must take the full (un-tileable) axis
    divisors = [d for d in range(_LANES, M + 1, _LANES) if M % d == 0]

    def cost(mt):
        return K * mt * 2 + tco * mt * 4 + 2 * tco * mt * out_bytes

    fitting = [d for d in divisors if cost(d) <= budget]
    return max(fitting) if fitting else min(divisors)


def _conv2d_pallas_same(x_nchw, w_oihw, bias, *, padding, dilation,
                        compute_dtype):
    N, C_in, H, W = x_nchw.shape
    C_out, _, KH, KW = w_oihw.shape
    M = H * W
    K = KH * KW * C_in
    out_dtype = x_nchw.dtype

    shifts = [(kh * dilation - padding) * W + (kw * dilation - padding)
              for kh in range(KH) for kw in range(KW)]
    pad_lo = _round_up(max(0, -min(shifts)), _LANES)
    pad_hi = _round_up(max(0, max(shifts)), _LANES)

    # Weight slab (C_out, K) with columns ordered (kh, kw, cin) to match the
    # kernel's im2col row order.  Weights are tiny -> wrapper transpose is free.
    w_mat = jnp.transpose(w_oihw, (0, 2, 3, 1)).reshape(C_out, K)
    w_mat = w_mat.astype(compute_dtype)
    b_col = bias.reshape(C_out, 1).astype(jnp.float32)
    masks = _tap_masks(H, W, KH, KW, padding, dilation, compute_dtype)
    # Cast activations to bf16 in the wrapper: halves activation DMA and every
    # in-kernel temporary.  NCHW spatial flatten is a free contiguous reshape.
    x_flat = x_nchw.reshape(N, C_in, M).astype(compute_dtype)

    tco = _choose_cout_tile(C_out)
    n_co = C_out // tco
    out_itm = jnp.dtype(out_dtype).itemsize
    M_t = _choose_spatial_tile(M, K, tco, out_itm)
    n_sp = M // M_t

    kernel = functools.partial(
        _conv2d_same_kernel, H=H, W=W, KH=KH, KW=KW, padding=padding,
        dilation=dilation, C_in=C_in, pad_lo=pad_lo, pad_hi=pad_hi,
        M=M, M_t=M_t, n_sp=n_sp, compute_dtype=compute_dtype)

    # Scoped-VMEM request computed from the actual tile sizes (double-buffered
    # inputs/outputs + persistent scratches + matmul temporaries) + headroom.
    itm = jnp.dtype(compute_dtype).itemsize
    needed = (2 * (C_in * M * itm              # x block
                   + tco * K * itm             # weight tile
                   + KH * KW * M_t * itm       # mask tile
                   + tco * 4                   # bias
                   + tco * M_t * out_itm)      # output block
              + C_in * (pad_lo + M + pad_hi) * itm     # halo scratch
              + K * M_t * itm                          # im2col scratch
              + C_in * (pad_lo + M_t + pad_hi) * itm   # tap window temp
              + 2 * tco * M_t * 4)                     # f32 acc temporaries
    vmem_limit = max(min(int(needed * 5 // 4) + (2 << 20), 96 << 20), 16 << 20)

    # Grid: batch (parallel) x spatial tiles x Cout tiles.  Cout must be the
    # innermost ("arbitrary") axis so the im2col scratch built at c==0 is
    # reused by the remaining Cout tiles; the spatial axis is "arbitrary" so
    # the halo scratch built at s==0,c==0 is reused by all spatial tiles.
    # (Weight tiles are re-DMA'd per batch element -- accepted trade-off since
    # the im2col/halo hoists need these axes inner.)
    # TODO(synk): when N == 1 on v7x only one TensorCore is busy; a parallel
    # split of the Cout/spatial axes would recover it.
    out_flat = pl.pallas_call(
        kernel,
        out_shape=jax.ShapeDtypeStruct((N, C_out, M), out_dtype),
        grid_spec=pltpu.PrefetchScalarGridSpec(
            num_scalar_prefetch=0,
            grid=(N, n_sp, n_co),
            in_specs=[
                pl.BlockSpec((1, C_in, M), lambda n, s, c: (n, 0, 0)),
                pl.BlockSpec((tco, K), lambda n, s, c: (c, 0)),
                pl.BlockSpec((KH * KW, M_t), lambda n, s, c: (0, s)),
                pl.BlockSpec((tco, 1), lambda n, s, c: (c, 0)),
            ],
            out_specs=pl.BlockSpec((1, tco, M_t), lambda n, s, c: (n, c, s)),
            scratch_shapes=[
                pltpu.VMEM((C_in, pad_lo + M + pad_hi), compute_dtype),
                pltpu.VMEM((K, M_t), compute_dtype),
            ],
        ),
        compiler_params=pltpu.CompilerParams(
            dimension_semantics=("parallel", "arbitrary", "arbitrary"),
            vmem_limit_bytes=vmem_limit),
    )(x_flat, w_mat, masks, b_col)

    return out_flat.reshape(N, C_out, H, W)


# ------------------- general fallback (arbitrary stride etc.) -----------------

def _conv2d_nhwc_kernel(x_ref, w_ref, b_ref, o_ref, *, H_out, W_out, KH, KW,
                        stride, dilation, C_in, C_out):
    x = x_ref[0]                                          # (Hp, Wp, C_in)
    acc = jnp.zeros((H_out * W_out, C_out), jnp.float32)
    for kh in range(KH):
        for kw in range(KW):
            patch = lax.slice(
                x, (kh * dilation, kw * dilation, 0),
                (kh * dilation + (H_out - 1) * stride + 1,
                 kw * dilation + (W_out - 1) * stride + 1, C_in),
                (stride, stride, 1))
            acc = acc + jnp.dot(patch.reshape(H_out * W_out, C_in),
                                w_ref[kh, kw],
                                preferred_element_type=jnp.float32)
    acc = acc + b_ref[0].astype(jnp.float32)
    o_ref[0] = acc.reshape(H_out, W_out, C_out).astype(o_ref.dtype)


def _conv2d_pallas_general(x_nchw, w_oihw, bias, *, stride, padding, dilation,
                           H_out, W_out):
    # TODO(synk): unoptimized general stride/dilation fallback (per-tap
    # matmuls, NHWC, wrapper-side pad, un-tiled blocks); the optimized
    # lane-dense path above covers the stride-1 "same"-shaped convs this
    # module is used with.
    N, C_in, H, W = x_nchw.shape
    C_out, _, KH, KW = w_oihw.shape
    x_nhwc = jnp.transpose(x_nchw, (0, 2, 3, 1))
    x_pad = jnp.pad(x_nhwc,
                    ((0, 0), (padding, padding), (padding, padding), (0, 0)))
    Hp, Wp = H + 2 * padding, W + 2 * padding
    w_hwio = jnp.transpose(w_oihw, (2, 3, 1, 0))
    b2 = bias.reshape(1, C_out)

    kernel = functools.partial(
        _conv2d_nhwc_kernel, H_out=H_out, W_out=W_out, KH=KH, KW=KW,
        stride=stride, dilation=dilation, C_in=C_in, C_out=C_out)

    out_nhwc = pl.pallas_call(
        kernel,
        out_shape=jax.ShapeDtypeStruct((N, H_out, W_out, C_out), x_nchw.dtype),
        grid_spec=pltpu.PrefetchScalarGridSpec(
            num_scalar_prefetch=0,
            grid=(N,),
            in_specs=[
                pl.BlockSpec((1, Hp, Wp, C_in), lambda n: (n, 0, 0, 0)),
                pl.BlockSpec((KH, KW, C_in, C_out), lambda n: (0, 0, 0, 0)),
                pl.BlockSpec((1, C_out), lambda n: (0, 0)),
            ],
            out_specs=pl.BlockSpec((1, H_out, W_out, C_out),
                                   lambda n: (n, 0, 0, 0)),
        ),
        compiler_params=pltpu.CompilerParams(dimension_semantics=("parallel",)),
    )(x_pad, w_hwio, b2)
    return jnp.transpose(out_nhwc, (0, 3, 1, 2))


def conv2d_pallas(x_nchw, w_oihw, bias, *, stride=1, padding=0, dilation=1,
                  compute_dtype=jnp.bfloat16):
    """2D convolution (groups=1, zero padding) via Pallas TPU kernels."""
    N, C_in, H, W = x_nchw.shape
    C_out, C_in_w, KH, KW = w_oihw.shape
    assert C_in_w == C_in
    H_out = (H + 2 * padding - dilation * (KH - 1) - 1) // stride + 1
    W_out = (W + 2 * padding - dilation * (KW - 1) - 1) // stride + 1
    if stride == 1 and H_out == H and W_out == W:
        return _conv2d_pallas_same(x_nchw, w_oihw, bias, padding=padding,
                                   dilation=dilation,
                                   compute_dtype=compute_dtype)
    return _conv2d_pallas_general(x_nchw, w_oihw, bias, stride=stride,
                                  padding=padding, dilation=dilation,
                                  H_out=H_out, W_out=W_out)


# ------------------------- RTT_O4_Conv2d (JAX version) ------------------------

class RTTO4Conv2dPallas:
    def __init__(self, in_channels, out_channels, kernel_size, ranks=8,
                 stride=1, padding=0, dilation=1, groups=1, bias=True,
                 key=None, dtype=jnp.float32):
        # TODO(synk): groups > 1 and non-'zeros' padding modes are not
        # implemented in the Pallas conv path.
        assert groups == 1
        self.in_channels = in_channels
        self.out_channels = out_channels
        self.kernel_size = (kernel_size, kernel_size)
        self.stride = stride
        self.padding = padding
        self.dilation = dilation
        self.groups = groups
        self.order = 4
        self.ranks = ranks
        self.in_shape = factorize(in_channels // groups, self.order)
        self.out_shape = factorize(out_channels // groups, self.order)

        KH, KW = self.kernel_size
        k0, k1, k2, k3 = jax.random.split(key, 4)

        # Deterministic init matching RTT_O4_Conv2d.init_params bounds.
        b0 = math.sqrt(6.0 / (self.in_shape[0] + self.out_shape[0] * ranks))
        self.G0 = jax.random.uniform(
            k0, (self.in_shape[0], self.out_shape[0], ranks),
            minval=-b0, maxval=b0, dtype=dtype)

        b1 = math.sqrt(6.0 / (self.in_shape[1] * ranks + self.out_shape[1] * ranks))
        self.G1 = jax.random.uniform(
            k1, (self.in_shape[1], self.out_shape[1], ranks, ranks),
            minval=-b1, maxval=b1, dtype=dtype)

        b2 = math.sqrt(6.0 / (self.in_shape[2] * ranks + self.out_shape[2] * ranks))
        self.G2 = jax.random.uniform(
            k2, (self.in_shape[2], self.out_shape[2], ranks, ranks),
            minval=-b2, maxval=b2, dtype=dtype)

        b3 = math.sqrt(6.0 / (KH * KW * ranks + KH * KW * 1))
        self.G3 = jax.random.uniform(
            k3, (KH, KW, groups, ranks), minval=-b3, maxval=b3, dtype=dtype)

        self.bias = jnp.zeros((out_channels,), dtype) if bias else None

    def assemble_weights(self):
        # Exactly mirrors the PyTorch forward's einsum chain + raw reshape.
        weights_l = jnp.einsum('iar,jbrs->ijabs', self.G0, self.G1)
        weights_r = jnp.einsum('kcst,ghwt->ghwkcs', self.G2, self.G3)
        weights = jnp.einsum('ijabs,ghwkcs->gijkabchw', weights_l, weights_r)
        return jnp.reshape(
            weights,
            (self.out_channels, self.in_channels // self.groups,
             self.kernel_size[0], self.kernel_size[1]))

    def __call__(self, x_nchw):
        w = self.assemble_weights()
        b = self.bias if self.bias is not None else jnp.zeros(
            (self.out_channels,), x_nchw.dtype)
        return conv2d_pallas(x_nchw, w, b, stride=self.stride,
                             padding=self.padding, dilation=self.dilation)


# ------------------------------------ main ------------------------------------

if __name__ == "__main__":
    key = jax.random.PRNGKey(0)
    k1, k2, kx1, kx2 = jax.random.split(key, 4)

    def check(layer, x):
        out = jax.block_until_ready(layer(x))
        # Reference conv with the same bf16-rounded operands the kernel feeds
        # the MXU (f32 accumulation in both): only accumulation-order differs.
        w = layer.assemble_weights()
        w_bf = w.astype(jnp.bfloat16).astype(jnp.float32)
        x_bf = x.astype(jnp.bfloat16).astype(jnp.float32)
        ref = lax.conv_general_dilated(
            x_bf, w_bf, window_strides=(1, 1),
            padding=[(layer.padding, layer.padding)] * 2,
            rhs_dilation=(layer.dilation, layer.dilation),
            dimension_numbers=('NCHW', 'OIHW', 'NCHW'))
        ref = ref + layer.bias[None, :, None, None]
        assert out.shape == ref.shape, (out.shape, ref.shape)
        err = float(jnp.max(jnp.abs(out - ref)))
        assert err < 1e-3, err

    # Case 1: C_in % 8 != 0 -> register-built im2col slab path.
    layer1 = RTTO4Conv2dPallas(4, 8, kernel_size=3, ranks=4, stride=1,
                               padding=1, dilation=1, groups=1, bias=True,
                               key=k1)
    x1 = jax.random.normal(kx1, (2, 4, 16, 16), dtype=jnp.float32)
    check(layer1, x1)

    # Case 2: C_in % 8 == 0 -> sublane-aligned direct stores into the scratch.
    layer2 = RTTO4Conv2dPallas(8, 16, kernel_size=3, ranks=4, stride=1,
                               padding=1, dilation=1, groups=1, bias=True,
                               key=k2)
    x2 = jax.random.normal(kx2, (2, 8, 16, 16), dtype=jnp.float32)
    check(layer2, x2)

    print("KERNEL_OK")
</pallas_src>

<mosaic_0001>
module attributes {stable_mosaic.version = 11 : i64} {
  func.func @_conv2d_same_kernel(%arg0: i32, %arg1: i32, %arg2: i32, %arg3: memref<1x4x256xbf16, #tpu.memory_space<vmem>>, %arg4: memref<8x36xbf16, #tpu.memory_space<vmem>>, %arg5: memref<9x256xbf16, #tpu.memory_space<vmem>>, %arg6: memref<8x1xf32, #tpu.memory_space<vmem>>, %arg7: memref<1x8x256xf32, #tpu.memory_space<vmem>>, %arg8: memref<4x512xbf16, #tpu.memory_space<vmem>>, %arg9: memref<36x256xbf16, #tpu.memory_space<vmem>>) attributes {dimension_semantics = [#tpu.dimension_semantics<parallel>, #tpu.dimension_semantics<arbitrary>, #tpu.dimension_semantics<arbitrary>], iteration_bounds = array<i64: 2, 1, 1>, scalar_prefetch = 0 : i64, scratch_operands = 2 : i64, tpu.core_type = #tpu.core_type<tc>, window_params = [{transform_indices = @transform_0, window_bounds = array<i64: 1, 4, 256>}, {transform_indices = @transform_1, window_bounds = array<i64: 8, 36>}, {transform_indices = @transform_2, window_bounds = array<i64: 9, 256>}, {transform_indices = @transform_3, window_bounds = array<i64: 8, 1>}, {transform_indices = @transform_4, window_bounds = array<i64: 1, 8, 256>}]} {
    %c0_i32 = arith.constant 0 : i32
    %0 = arith.cmpi eq, %arg1, %c0_i32 : i32
    %c0_i32_0 = arith.constant 0 : i32
    %1 = arith.cmpi eq, %arg2, %c0_i32_0 : i32
    %2 = arith.andi %0, %1 : i1
    %3 = arith.extui %2 : i1 to i32
    %c0_i32_1 = arith.constant 0 : i32
    %4 = arith.cmpi ne, %3, %c0_i32_1 : i32
    scf.if %4 {
      %cst_12 = arith.constant 0.000000e+00 : bf16
      %17 = vector.broadcast %cst_12 : bf16 to vector<4x128xbf16>
      %c0_13 = arith.constant 0 : index
      %c0_14 = arith.constant 0 : index
      %c0_15 = arith.constant 0 : index
      %18 = vector.load %arg3[%c0_13, %c0_14, %c0_15] : memref<1x4x256xbf16, #tpu.memory_space<vmem>>, vector<1x4x256xbf16>
      %19 = vector.shape_cast %18 : vector<1x4x256xbf16> to vector<4x256xbf16>
      %cst_16 = arith.constant 0.000000e+00 : bf16
      %20 = vector.broadcast %cst_16 : bf16 to vector<4x128xbf16>
      %21 = tpu.concatenate %17, %19, %20 in 1 : vector<4x128xbf16>, vector<4x256xbf16>, vector<4x128xbf16> -> vector<4x512xbf16>
      %c0_17 = arith.constant 0 : index
      %c0_18 = arith.constant 0 : index
      %22 = vector.load %arg8[%c0_17, %c0_18] : memref<4x512xbf16, #tpu.memory_space<vmem>>, vector<4x512xbf16>
      tpu.vector_store %arg8[%c0_17, %c0_18], %21 {strides = array<i32>} : memref<4x512xbf16, #tpu.memory_space<vmem>>, vector<4x512xbf16>,
    } else {
    }
    %c0_i32_2 = arith.constant 0 : i32
    %5 = arith.cmpi eq, %arg2, %c0_i32_2 : i32
    %6 = arith.extui %5 : i1 to i32
    %c0_i32_3 = arith.constant 0 : i32
    %7 = arith.cmpi ne, %6, %c0_i32_3 : i32
    scf.if %7 {
      %c0_12 = arith.constant 0 : index
      %c0_13 = arith.constant 0 : index
      %17 = vector.load %arg8[%c0_12, %c0_13] : memref<4x512xbf16, #tpu.memory_space<vmem>>, vector<4x512xbf16>
      %c0_14 = arith.constant 0 : index
      %c0_15 = arith.constant 0 : index
      %18 = vector.load %arg5[%c0_14, %c0_15] : memref<9x256xbf16, #tpu.memory_space<vmem>>, vector<9x256xbf16>
      %19 = vector.extract_strided_slice %17 {offsets = [0, 111], sizes = [4, 256], strides = [1, 1]} : vector<4x512xbf16> to vector<4x256xbf16>
      %20 = vector.extract_strided_slice %18 {offsets = [0, 0], sizes = [1, 256], strides = [1, 1]} : vector<9x256xbf16> to vector<1x256xbf16>
      %21 = vector.broadcast %20 : vector<1x256xbf16> to vector<4x256xbf16>
      %22 = arith.mulf %19, %21 : vector<4x256xbf16>
      %23 = vector.extract_strided_slice %17 {offsets = [0, 112], sizes = [4, 256], strides = [1, 1]} : vector<4x512xbf16> to vector<4x256xbf16>
      %24 = vector.extract_strided_slice %18 {offsets = [1, 0], sizes = [1, 256], strides = [1, 1]} : vector<9x256xbf16> to vector<1x256xbf16>
      %25 = vector.broadcast %24 : vector<1x256xbf16> to vector<4x256xbf16>
      %26 = arith.mulf %23, %25 : vector<4x256xbf16>
      %27 = vector.extract_strided_slice %17 {offsets = [0, 113], sizes = [4, 256], strides = [1, 1]} : vector<4x512xbf16> to vector<4x256xbf16>
      %28 = vector.extract_strided_slice %18 {offsets = [2, 0], sizes = [1, 256], strides = [1, 1]} : vector<9x256xbf16> to vector<1x256xbf16>
      %29 = vector.broadcast %28 : vector<1x256xbf16> to vector<4x256xbf16>
      %30 = arith.mulf %27, %29 : vector<4x256xbf16>
      %31 = vector.extract_strided_slice %17 {offsets = [0, 127], sizes = [4, 256], strides = [1, 1]} : vector<4x512xbf16> to vector<4x256xbf16>
      %32 = vector.extract_strided_slice %18 {offsets = [3, 0], sizes = [1, 256], strides = [1, 1]} : vector<9x256xbf16> to vector<1x256xbf16>
      %33 = vector.broadcast %32 : vector<1x256xbf16> to vector<4x256xbf16>
      %34 = arith.mulf %31, %33 : vector<4x256xbf16>
      %35 = vector.extract_strided_slice %17 {offsets = [0, 128], sizes = [4, 256], strides = [1, 1]} : vector<4x512xbf16> to vector<4x256xbf16>
      %36 = vector.extract_strided_slice %18 {offsets = [4, 0], sizes = [1, 256], strides = [1, 1]} : vector<9x256xbf16> to vector<1x256xbf16>
      %37 = vector.broadcast %36 : vector<1x256xbf16> to vector<4x256xbf16>
      %38 = arith.mulf %35, %37 : vector<4x256xbf16>
      %39 = vector.extract_strided_slice %17 {offsets = [0, 129], sizes = [4, 256], strides = [1, 1]} : vector<4x512xbf16> to vector<4x256xbf16>
      %40 = vector.extract_strided_slice %18 {offsets = [5, 0], sizes = [1, 256], strides = [1, 1]} : vector<9x256xbf16> to vector<1x256xbf16>
      %41 = vector.broadcast %40 : vector<1x256xbf16> to vector<4x256xbf16>
      %42 = arith.mulf %39, %41 : vector<4x256xbf16>
      %43 = vector.extract_strided_slice %17 {offsets = [0, 143], sizes = [4, 256], strides = [1, 1]} : vector<4x512xbf16> to vector<4x256xbf16>
      %44 = vector.extract_strided_slice %18 {offsets = [6, 0], sizes = [1, 256], strides = [1, 1]} : vector<9x256xbf16> to vector<1x256xbf16>
      %45 = vector.broadcast %44 : vector<1x256xbf16> to vector<4x256xbf16>
      %46 = arith.mulf %43, %45 : vector<4x256xbf16>
      %47 = vector.extract_strided_slice %17 {offsets = [0, 144], sizes = [4, 256], strides = [1, 1]} : vector<4x512xbf16> to vector<4x256xbf16>
      %48 = vector.extract_strided_slice %18 {offsets = [7, 0], sizes = [1, 256], strides = [1, 1]} : vector<9x256xbf16> to vector<1x256xbf16>
      %49 = vector.broadcast %48 : vector<1x256xbf16> to vector<4x256xbf16>
      %50 = arith.mulf %47, %49 : vector<4x256xbf16>
      %51 = vector.extract_strided_slice %17 {offsets = [0, 145], sizes = [4, 256], strides = [1, 1]} : vector<4x512xbf16> to vector<4x256xbf16>
      %52 = vector.extract_strided_slice %18 {offsets = [8, 0], sizes = [1, 256], strides = [1, 1]} : vector<9x256xbf16> to vector<1x256xbf16>
      %53 = vector.broadcast %52 : vector<1x256xbf16> to vector<4x256xbf16>
      %54 = arith.mulf %51, %53 : vector<4x256xbf16>
      %55 = vector.shape_cast %22 : vector<4x256xbf16> to vector<1x4x256xbf16>
      %56 = vector.shape_cast %26 : vector<4x256xbf16> to vector<1x4x256xbf16>
      %57 = vector.shape_cast %30 : vector<4x256xbf16> to vector<1x4x256xbf16>
      %58 = vector.shape_cast %34 : vector<4x256xbf16> to vector<1x4x256xbf16>
      %59 = vector.shape_cast %38 : vector<4x256xbf16> to vector<1x4x256xbf16>
      %60 = vector.shape_cast %42 : vector<4x256xbf16> to vector<1x4x256xbf16>
      %61 = vector.shape_cast %46 : vector<4x256xbf16> to vector<1x4x256xbf16>
      %62 = vector.shape_cast %50 : vector<4x256xbf16> to vector<1x4x256xbf16>
      %63 = vector.shape_cast %54 : vector<4x256xbf16> to vector<1x4x256xbf16>
      %64 = tpu.concatenate %55, %56, %57, %58, %59, %60, %61, %62, %63 in 0 : vector<1x4x256xbf16>, vector<1x4x256xbf16>, vector<1x4x256xbf16>, vector<1x4x256xbf16>, vector<1x4x256xbf16>, vector<1x4x256xbf16>, vector<1x4x256xbf16>, vector<1x4x256xbf16>, vector<1x4x256xbf16> -> vector<9x4x256xbf16>
      %65 = vector.shape_cast %64 : vector<9x4x256xbf16> to vector<36x256xbf16>
      %c0_16 = arith.constant 0 : index
      %c0_17 = arith.constant 0 : index
      %66 = vector.load %arg9[%c0_16, %c0_17] : memref<36x256xbf16, #tpu.memory_space<vmem>>, vector<36x256xbf16>
      tpu.vector_store %arg9[%c0_16, %c0_17], %65 {strides = array<i32>} : memref<36x256xbf16, #tpu.memory_space<vmem>>, vector<36x256xbf16>,
    } else {
    }
    %c0 = arith.constant 0 : index
    %c0_4 = arith.constant 0 : index
    %8 = vector.load %arg4[%c0, %c0_4] : memref<8x36xbf16, #tpu.memory_space<vmem>>, vector<8x36xbf16>
    %c0_5 = arith.constant 0 : index
    %c0_6 = arith.constant 0 : index
    %9 = vector.load %arg9[%c0_5, %c0_6] : memref<36x256xbf16, #tpu.memory_space<vmem>>, vector<36x256xbf16>
    %cst = arith.constant dense<0.000000e+00> : vector<8x256xf32>
    %10 = tpu.matmul %8, %9, %cst {dimension_numbers = #tpu.dot_dimension_numbers<[1], [0], [0], [1], [0, 0, 1, 1], [], []>} : vector<8x36xbf16>, vector<36x256xbf16>, vector<8x256xf32> -> vector<8x256xf32>
    %c0_7 = arith.constant 0 : index
    %c0_8 = arith.constant 0 : index
    %11 = vector.load %arg6[%c0_7, %c0_8] : memref<8x1xf32, #tpu.memory_space<vmem>>, vector<8x1xf32>
    %12 = vector.broadcast %11 : vector<8x1xf32> to vector<8x256xf32>
    %13 = arith.addf %10, %12 : vector<8x256xf32>
    %c0_9 = arith.constant 0 : index
    %c0_10 = arith.constant 0 : index
    %c0_11 = arith.constant 0 : index
    %14 = vector.load %arg7[%c0_9, %c0_10, %c0_11] : memref<1x8x256xf32, #tpu.memory_space<vmem>>, vector<1x8x256xf32>
    %15 = vector.shape_cast %14 : vector<1x8x256xf32> to vector<8x256xf32>
    %16 = vector.shape_cast %13 : vector<8x256xf32> to vector<1x8x256xf32>
    tpu.vector_store %arg7[%c0_9, %c0_10, %c0_11], %16 {strides = array<i32>} : memref<1x8x256xf32, #tpu.memory_space<vmem>>, vector<1x8x256xf32>,
    return
  }
  func.func @transform_0(%arg0: i32, %arg1: i32, %arg2: i32) -> (i32, i32, i32) {
    %c0_i32 = arith.constant 0 : i32
    %c0_i32_0 = arith.constant 0 : i32
    %c0_i32_1 = arith.constant 0 : i32
    return %arg0, %c0_i32, %c0_i32_0 : i32, i32, i32
  }
  func.func @transform_1(%arg0: i32, %arg1: i32, %arg2: i32) -> (i32, i32) {
    %c0_i32 = arith.constant 0 : i32
    %c0_i32_0 = arith.constant 0 : i32
    return %arg2, %c0_i32 : i32, i32
  }
  func.func @transform_2(%arg0: i32, %arg1: i32, %arg2: i32) -> (i32, i32) {
    %c0_i32 = arith.constant 0 : i32
    %c0_i32_0 = arith.constant 0 : i32
    return %c0_i32, %arg1 : i32, i32
  }
  func.func @transform_3(%arg0: i32, %arg1: i32, %arg2: i32) -> (i32, i32) {
    %c0_i32 = arith.constant 0 : i32
    %c0_i32_0 = arith.constant 0 : i32
    return %arg2, %c0_i32 : i32, i32
  }
  func.func @transform_4(%arg0: i32, %arg1: i32, %arg2: i32) -> (i32, i32, i32) {
    %c0_i32 = arith.constant 0 : i32
    return %arg0, %arg2, %arg1 : i32, i32, i32
  }
}

</mosaic_0001>

<llo_original>
// kernel: tpu_custom_call.1
$region0: #{tpu_custom_call.1}
  #allocation0 [shape = 'u32[]', space=smem, size = 0x4, offset = 0x4, fixed_abs, tag = 'smem constant byte address 0x4 - core index']
  #allocation1 [shape = 'u32[72,128]{1,0:T(1,128)}', space=vmem, size = 0x9000, scoped, tag = 'internal scratch']
  #allocation2 [shape = 'bf16[4,512]{1,0:T(4,128)(2,1)}', space=vmem, size = 0x1000, scoped, tag = 'scratch operand']
  #allocation3 [shape = 'bf16[36,256]{1,0:T(8,128)(2,1)}', space=vmem, size = 0x5000, scoped, tag = 'scratch operand']
  %s0 = inlined_call_operand.vmem [shape: bf16[2,4,256], index: 0, kind: input, shape index: {}]
  %s1 = inlined_call_operand.hbm [shape: bf16[8,36], index: 1, kind: input, shape index: {}]
  %s2 = inlined_call_operand.hbm [shape: bf16[9,256], index: 2, kind: input, shape index: {}]
  %s3 = inlined_call_operand.vmem [shape: f32[8,1], index: 3, kind: input, shape index: {}]
  %s4 = inlined_call_operand.hbm [shape: f32[2,8,256], index: 4, kind: output, shape index: {}]
  %s5 = sld [smem:[#allocation0]]
  $region65: #{tpu_custom_call.1} parent=0
    _
  %s7 = ssub.s32 1, %s5
  %s8 = scalar_select 0, %s7, %s5
  $region1: #{tpu_custom_call.1} parent=0
    #allocation4 [shape = 'u8[2048]{0}', space=vmem, size = 0x800, scoped, tag = 'input window, operand 1, single buffered']
    #allocation5 [shape = 's32[2]{0}', space=sflag, size = 0x8, scoped, tag = 'scoped memory for tpu_custom_call.1']
    #allocation6 [shape = 's32[2]{0}', space=sflag, size = 0x8, scoped, tag = 'scoped memory for tpu_custom_call.1']
    #allocation7 [shape = 'u8[8192]{0}', space=vmem, size = 0x2000, scoped, tag = 'input window, operand 2, single buffered']
    #allocation8 [shape = 's32[1]{0}', space=sflag, size = 0x4, scoped, tag = 'scoped memory for tpu_custom_call.1']
    #allocation9 [shape = 'u8[16384]{0}', space=vmem, size = 0x4000, scoped, tag = 'output window, operand 0']
    %9 = vsyncpa [#allocation5], 0
    %10 = vsyncpa [#allocation8], 0
    %11 = vsyncpa [#allocation6], 0
    %s12 = scalar_lea.sflag [#allocation6], 1
    %13 = vsyncpa %s12, 0
    loop: start=0, step=1, limit=4
    $region2: #{tpu_custom_call.1} parent=1 // loop_pre_header
      _
    $region3: #{tpu_custom_call.1} parent=1 // loop_header
      %s15 = sphi 0, %s19
      %p16 = scmp.ge.s32.totalorder %s15, 4
      %s22 = sphi 0, %s41
      %s23 = sphi 0, %s37
      %s24 = sphi 0, %s33
      %s25 = sphi 0, %s22
      %s26 = sphi 0, %s23
      %s27 = sphi 0, %s24
      %s28 = sphi 0, %s25
      %s29 = sphi 0, %s26
      %s30 = sphi 0, %s27
      %s44 = sphi 0, %s46
      %s47 = sphi 0, %s44
      %s48 = sphi 0, %s47
      %s64 = sphi 0, %s48
      %s70 = sphi 0, %s72
      %s73 = sphi 0, %s70
      %s74 = sphi 0, %s73
      %s90 = sphi 0, %s74
      %s96 = sphi 0, %s98
      %s99 = sphi 0, %s96
      %s100 = sphi 0, %s99
      %s116 = sphi 0, %s100
      %s122 = sphi 0, %s124
      %s125 = sphi 0, %s122
      %s126 = sphi 0, %s125
      %s142 = sphi 0, %s126
      %s152 = sphi 0, %s154
      %s155 = sphi 0, %s152
      %s156 = sphi 0, %s155
      %s172 = sphi 0, %s156
    $region4: #{tpu_custom_call.1} parent=1 // loop_header_branch
      %18 = sbr.rel (%p16) target = $region8
    $region5: #{tpu_custom_call.1} parent=1 // loop_body
      %s20 = ssub.s32 %s15, 1
      %s21 = ssub.s32 %s15, 2
      %s31 = sadd.s32 1, %s24
      %p32 = scmp.ge.s32.totalorder %s31, 1
      %s33 = scalar_select %p32, 0, %s31
      %s34 = sadd.s32 1, %s23
      %s35 = scalar_select %p32, %s34, %s23
      %p36 = scmp.ge.s32.totalorder %s35, 1
      %s37 = scalar_select %p36, 0, %s35
      %s38 = sadd.s32 1, %s22
      %s39 = scalar_select %p36, %s38, %s22
      %p40 = scmp.ge.s32.totalorder %s39, 2
      %s41 = scalar_select %p40, 0, %s39
      %s42 = ssub.s32 %s22, %s41
      %p43 = scmp.eq.s32.totalorder %s42, 0
      %s45 = sadd.s32 %s44, 1
      %s46 = scalar_select %p43, %s44, %s45
      %p49 = pneg %p43
      %p50 = scmp.eq.s32.totalorder %s15, 1
      %p51 = por %p49, %p50
      %p52 = scmp.ne.s32.totalorder %s44, %s47
      %p53 = scmp.eq.s32.totalorder %s15, 0
      %p54 = por %p52, %p53
      %p55 = scmp.ne.s32.totalorder %s44, %s47
      %p56 = scmp.eq.s32.totalorder %s20, 1
      %p57 = por %p55, %p56
      %p58 = scmp.ne.s32.totalorder %s47, %s48
      %p59 = scmp.eq.s32.totalorder %s20, 0
      %p60 = por %p58, %p59
      %p61 = scmp.ne.s32.totalorder %s47, %s48
      %p62 = scmp.eq.s32.totalorder %s21, 1
      %p63 = por %p61, %p62
      %p65 = scmp.ne.s32.totalorder %s48, %s64
      %p66 = scmp.eq.s32.totalorder %s21, 0
      %p67 = por %p65, %p66
      %s68 = ssub.s32 %s24, %s33
      %p69 = scmp.eq.s32.totalorder %s68, 0
      %s71 = sadd.s32 %s70, 1
      %s72 = scalar_select %p69, %s70, %s71
      %p75 = pneg %p69
      %p76 = scmp.eq.s32.totalorder %s15, 1
      %p77 = por %p75, %p76
      %p78 = scmp.ne.s32.totalorder %s70, %s73
      %p79 = scmp.eq.s32.totalorder %s15, 0
      %p80 = por %p78, %p79
      %p81 = scmp.ne.s32.totalorder %s70, %s73
      %p82 = scmp.eq.s32.totalorder %s20, 1
      %p83 = por %p81, %p82
      %p84 = scmp.ne.s32.totalorder %s73, %s74
      %p85 = scmp.eq.s32.totalorder %s20, 0
      %p86 = por %p84, %p85
      %p87 = scmp.ne.s32.totalorder %s73, %s74
      %p88 = scmp.eq.s32.totalorder %s21, 1
      %p89 = por %p87, %p88
      %p91 = scmp.ne.s32.totalorder %s74, %s90
      %p92 = scmp.eq.s32.totalorder %s21, 0
      %p93 = por %p91, %p92
      %s94 = ssub.s32 %s23, %s37
      %p95 = scmp.eq.s32.totalorder %s94, 0
      %s97 = sadd.s32 %s96, 1
      %s98 = scalar_select %p95, %s96, %s97
      %p101 = pneg %p95
      %p102 = scmp.eq.s32.totalorder %s15, 1
      %p103 = por %p101, %p102
      %p104 = scmp.ne.s32.totalorder %s96, %s99
      %p105 = scmp.eq.s32.totalorder %s15, 0
      %p106 = por %p104, %p105
      %p107 = scmp.ne.s32.totalorder %s96, %s99
      %p108 = scmp.eq.s32.totalorder %s20, 1
      %p109 = por %p107, %p108
      %p110 = scmp.ne.s32.totalorder %s99, %s100
      %p111 = scmp.eq.s32.totalorder %s20, 0
      %p112 = por %p110, %p111
      %p113 = scmp.ne.s32.totalorder %s99, %s100
      %p114 = scmp.eq.s32.totalorder %s21, 1
      %p115 = por %p113, %p114
      %p117 = scmp.ne.s32.totalorder %s100, %s116
      %p118 = scmp.eq.s32.totalorder %s21, 0
      %p119 = por %p117, %p118
      %s120 = ssub.s32 %s24, %s33
      %p121 = scmp.eq.s32.totalorder %s120, 0
      %s123 = sadd.s32 %s122, 1
      %s124 = scalar_select %p121, %s122, %s123
      %p127 = pneg %p121
      %p128 = scmp.eq.s32.totalorder %s15, 1
      %p129 = por %p127, %p128
      %p130 = scmp.ne.s32.totalorder %s122, %s125
      %p131 = scmp.eq.s32.totalorder %s15, 0
      %p132 = por %p130, %p131
      %p133 = scmp.ne.s32.totalorder %s122, %s125
      %p134 = scmp.eq.s32.totalorder %s20, 1
      %p135 = por %p133, %p134
      %p136 = scmp.ne.s32.totalorder %s125, %s126
      %p137 = scmp.eq.s32.totalorder %s20, 0
      %p138 = por %p136, %p137
      %p139 = scmp.ne.s32.totalorder %s125, %s126
      %p140 = scmp.eq.s32.totalorder %s21, 1
      %p141 = por %p139, %p140
      %p143 = scmp.ne.s32.totalorder %s126, %s142
      %p144 = scmp.eq.s32.totalorder %s21, 0
      %p145 = por %p143, %p144
      %s146 = ssub.s32 %s22, %s41
      %s147 = ssub.s32 %s24, %s33
      %s148 = sor.u32 %s146, %s147
      %s149 = ssub.s32 %s23, %s37
      %s150 = sor.u32 %s148, %s149
      %p151 = scmp.eq.s32.totalorder %s150, 0
      %s153 = sadd.s32 %s152, 1
      %s154 = scalar_select %p151, %s152, %s153
      %p157 = pneg %p151
      %p158 = scmp.eq.s32.totalorder %s15, 1
      %p159 = por %p157, %p158
      %p160 = scmp.ne.s32.totalorder %s152, %s155
      %p161 = scmp.eq.s32.totalorder %s15, 0
      %p162 = por %p160, %p161
      %p163 = scmp.ne.s32.totalorder %s152, %s155
      %p164 = scmp.eq.s32.totalorder %s20, 1
      %p165 = por %p163, %p164
      %p166 = scmp.ne.s32.totalorder %s155, %s156
      %p167 = scmp.eq.s32.totalorder %s20, 0
      %p168 = por %p166, %p167
      %p169 = scmp.ne.s32.totalorder %s155, %s156
      %p170 = scmp.eq.s32.totalorder %s21, 1
      %p171 = por %p169, %p170
      %p173 = scmp.ne.s32.totalorder %s156, %s172
      %p174 = scmp.eq.s32.totalorder %s21, 0
      %p175 = por %p173, %p174
      %p176 = scmp.le.s32.totalorder 1, %s15
      %p177 = scmp.lt.s32.totalorder %s15, 3
      %p178 = pnand %p176, %p177
      %p179 = pneg %p178
      // Predicated region
      $region9: #{tpu_custom_call.1} parent=5 // pred_check
        _
      $region10: #{tpu_custom_call.1} parent=5 // pred_check_branch
        %181 = sbr.rel (%p178) target = $region12
      $region11: #{tpu_custom_call.1} parent=5 // pred_region
        %s182 = ssub.s32 %s15, 1
        // Predicated region
        $region13: #{tpu_custom_call.1} parent=11 // pred_check
          %p183 = pneg %p86
        $region14: #{tpu_custom_call.1} parent=11 // pred_check_branch
          %185 = sbr.rel (%p183) target = $region16
        $region15: #{tpu_custom_call.1} parent=11 // pred_region
          %187 = vsyncadd [#allocation5], 0
          %s188 = smul.addr %s27, 4
          %s189 = scalar_lea.hbm %s1, %s188
          %s191 = sshll.u32 %s189, 4
          %s192 = int_to_ptr.hbm [resolvable:$true] %s191
          %s193 = sshll.u32 [#allocation4], 4
          %s194 = int_to_ptr.vmem [resolvable:$true] %s193
          %196 = dma.hbm_to_vmem [thread:$0]  %s192, 64, %s194, [#allocation5]
        $region16: #{tpu_custom_call.1} parent=11 // pred_fallthru
          _
        // Predicated region
        $region17: #{tpu_custom_call.1} parent=11 // pred_check
          %p197 = pneg %p112
        $region18: #{tpu_custom_call.1} parent=11 // pred_check_branch
          %199 = sbr.rel (%p197) target = $region20
        $region19: #{tpu_custom_call.1} parent=11 // pred_region
          %s200 = smul.u32 2, %s26
          %202 = vsyncadd [#allocation8], 0
          %s203 = smul.addr %s200, 4
          %s204 = scalar_lea.hbm %s2, %s203
          %s205 = sshll.u32 %s204, 4
          %s206 = int_to_ptr.hbm [resolvable:$true] %s205
          %s207 = sshll.u32 [#allocation7], 4
          %s208 = int_to_ptr.vmem [resolvable:$true] %s207
          %213 = dma.hbm_to_vmem [thread:$0]  %s206, 256, %s208, [#allocation8], 128, 128, 8
        $region20: #{tpu_custom_call.1} parent=11 // pred_fallthru
          _
        // Predicated region
        $region21: #{tpu_custom_call.1} parent=11 // pred_check
          %p214 = pneg %p138
        $region22: #{tpu_custom_call.1} parent=11 // pred_check_branch
          %216 = sbr.rel (%p214) target = $region24
        $region23: #{tpu_custom_call.1} parent=11 // pred_region
          %p217 = scmp.lt.s32.totalorder %s27, 0
          %s218 = scalar_select %p217, %s27, 0
          %s219 = smul.addr %s218, 8
          %s220 = scalar_lea.vmem %s3, %s219
        $region24: #{tpu_custom_call.1} parent=11 // pred_fallthru
          _
      $region12: #{tpu_custom_call.1} parent=5 // pred_fallthru
        _
      %p221 = scmp.lt.s32.totalorder %s15, 2
      // Predicated region
      $region25: #{tpu_custom_call.1} parent=5 // pred_check
        %p222 = pneg %p221
      $region26: #{tpu_custom_call.1} parent=5 // pred_check_branch
        %224 = sbr.rel (%p222) target = $region28
      $region27: #{tpu_custom_call.1} parent=5 // pred_region
        // Predicated region
        $region29: #{tpu_custom_call.1} parent=27 // pred_check
          %p225 = pneg %p54
        $region30: #{tpu_custom_call.1} parent=27 // pred_check_branch
          %227 = sbr.rel (%p225) target = $region32
        $region31: #{tpu_custom_call.1} parent=27 // pred_region
          %p228 = scmp.lt.s32.totalorder %s22, 1
          %s229 = scalar_select %p228, %s22, 1
          %s230 = smul.addr %s229, 2
          %s231 = smul.addr %s230, 2
          %s232 = scalar_lea.vmem %s0, %s231
        $region32: #{tpu_custom_call.1} parent=27 // pred_fallthru
          _
      $region28: #{tpu_custom_call.1} parent=5 // pred_fallthru
        _
      %p233 = scmp.le.s32.totalorder 1, %s15
      %p234 = scmp.lt.s32.totalorder %s15, 3
      %p235 = pnand %p233, %p234
      %p236 = pneg %p235
      // Predicated region
      $region33: #{tpu_custom_call.1} parent=5 // pred_check
        _
      $region34: #{tpu_custom_call.1} parent=5 // pred_check_branch
        %238 = sbr.rel (%p235) target = $region36
      $region35: #{tpu_custom_call.1} parent=5 // pred_region
        %s239 = ssub.s32 %s15, 1
        // Predicated region
        $region37: #{tpu_custom_call.1} parent=35 // pred_check
          %p240 = pneg %p86
        $region38: #{tpu_custom_call.1} parent=35 // pred_check_branch
          %242 = sbr.rel (%p240) target = $region40
        $region39: #{tpu_custom_call.1} parent=35 // pred_region
          %244 = dma.done [#allocation5], 64
        $region40: #{tpu_custom_call.1} parent=35 // pred_fallthru
          _
        // Predicated region
        $region41: #{tpu_custom_call.1} parent=35 // pred_check
          %p245 = pneg %p112
        $region42: #{tpu_custom_call.1} parent=35 // pred_check_branch
          %247 = sbr.rel (%p245) target = $region44
        $region43: #{tpu_custom_call.1} parent=35 // pred_region
          %249 = dma.done [#allocation8], 256
        $region44: #{tpu_custom_call.1} parent=35 // pred_fallthru
          _
        %p250 = scmp.lt.s32.totalorder %s25, 1
        %s251 = scalar_select %p250, %s25, 1
        %s252 = smul.addr %s251, 2
        %s253 = smul.addr %s252, 2
        %s254 = scalar_lea.vmem %s0, %s253
        %p255 = pneg %p60
        %p256 = pneg %p57
        %p257 = pneg %p86
        %p258 = pneg %p83
        %p259 = pneg %p112
        %p260 = pneg %p109
        %p261 = scmp.lt.s32.totalorder %s27, 0
        %s262 = scalar_select %p261, %s27, 0
        %s263 = smul.addr %s262, 8
        %s264 = scalar_lea.vmem %s3, %s263
        %p265 = pneg %p138
        %p266 = pneg %p135
        %p267 = pneg %p168
        %p268 = pneg %p165
        %s269 = sand.u32 %s155, 1
        %s270 = scalar_lea.sflag [#allocation6], %s269
        %s271 = sand.u32 %s155, 1
        %s272 = smul.addr %s271, 16
        %s273 = scalar_lea.vmem [#allocation9], %s272
        %p274 = scmp.lt.s32.totalorder %s25, 1
        %s275 = scalar_select %p274, %s25, 1
        %s276 = smul.addr %s275, 2
        %s277 = smul.addr %s276, 2
        %s278 = scalar_lea.vmem %s0, %s277
        %s279 = smul.u32 2, %s26
        %p280 = scmp.lt.s32.totalorder %s27, 0
        %s281 = scalar_select %p280, %s27, 0
        %s282 = smul.addr %s281, 8
        %s283 = scalar_lea.vmem %s3, %s282
        %s284 = smul.u32 2, %s26
        %p286 = scmp.eq.s32.totalorder %s26, 0
        %p287 = scmp.eq.s32.totalorder %s27, 0
        %p288 = pnand %p286, %p287
        %p289 = pneg %p288
        // Predicated region
        $region45: #{tpu_custom_call.1} parent=35 // pred_check
          _
        $region46: #{tpu_custom_call.1} parent=35 // pred_check_branch
          %291 = sbr.rel (%p288) target = $region48
        $region47: #{tpu_custom_call.1} parent=35 // pred_region
          %v292 = vld [vmem:[%s278] sm:$0xf]
          %294 = vst [vmem:[#allocation1] ss:$4 sm:$0xff] %v292
          %v295 = vld.sshfl [vmem:[#allocation1] sm:$0xff pattern:$0x73625140]
          %v297 = vld.sshfl [vmem:[#allocation1 + $0x8] sm:$0xff pattern:$0x73625140]
          %v300 = vrot.slane %v295, 6
          %v301 = vrot.slane %v297, 4
          %v302 = vrot.slane 0, 2
          %vm303 = vcmask 1041408
          %v306 = vsel %vm303, 0, %v300
          %vm307 = vcmask 1045508
          %v310 = vsel %vm307, %v301, %v302
          %vm311 = vcmask 1043456
          %v312 = vsel %vm311, %v306, %v310
          %314 = vst [vmem:[#allocation2] sm:$0xff] %v312
        $region48: #{tpu_custom_call.1} parent=35 // pred_fallthru
          _
        // Predicated region
        $region49: #{tpu_custom_call.1} parent=35 // pred_check
          %p315 = pneg %p287
        $region50: #{tpu_custom_call.1} parent=35 // pred_check_branch
          %317 = sbr.rel (%p315) target = $region52
        $region51: #{tpu_custom_call.1} parent=35 // pred_region
          %v318 = vld [vmem:[#allocation2] sm:$0xff]
          %v319 = vld [vmem:[#allocation7] sm:$0xff]
          %v320 = vld [vmem:[#allocation7 + $0x8] sm:$0x11]
          %v322 = vunpack.c.l.b16 %v319
          %v323 = vunpack.c.h.b16 %v319
          %v324 = vpack.c.b16 %v322, %v322
          %v325 = vpack.c.b16 %v323, %v323
          %v327 = vpack.i.b16 %v324, %v324
          %v329 = vperm.slane %v327, 0
          %v331 = vpack.i.b16 %v325, %v325
          %v333 = vperm.slane %v331, 0
          %v334 = vunpack.c.l.bf16 %v318
          %v335 = vunpack.c.h.bf16 %v318
          %v336 = vunpack.c.l.bf16 %v329
          %v337 = vunpack.c.l.bf16 %v333
          %v340 = vrot.slane %v337, 4
          %vm341 = vcmask 1043456
          %v342 = vsel %vm341, %v336, %v340
          %343 = vrot.lane.b32.xlu0 %v342, 111
          %v344 = vpop.permute.xlu0 %343
          %v345 = vrot.slane %v344, 4
          %vm346 = vcmask 908288
          %v347 = vsel %vm346, %v345, %v344
          %v350 = vmul.f32 %v334, %v347
          %v351 = vmul.f32 %v335, %v345
          %354 = vst [vmem:[#allocation1] ss:$2 sm:$0xff] %v350
          %s355 = scalar_lea.vmem [#allocation1], 16
          %356 = vst [vmem:[%s355] ss:$2 sm:$0xff] %v351
          %v357 = vld.sshfl [vmem:[#allocation1] sm:$0xff pattern:$0x75316420]
          %v358 = vld.sshfl [vmem:[#allocation1 + $0x8] sm:$0xff pattern:$0x75316420]
          %v359 = vld.sshfl [vmem:[#allocation1 + $0x10] sm:$0xff pattern:$0x75316420]
          %v363 = vpack.c.bf16 %v358, %v357
          %v364 = vpack.c.bf16 %v359, %v359
          %v365 = vshrl.u32 %v324, 16
          %v366 = vpack.i.b16 %v365, %v365
          %v368 = vperm.slane %v366, 0
          %v369 = vshrl.u32 %v325, 16
          %v370 = vpack.i.b16 %v369, %v369
          %v372 = vperm.slane %v370, 0
          %v373 = vunpack.c.l.bf16 %v368
          %v374 = vunpack.c.l.bf16 %v372
          %v377 = vrot.slane %v374, 4
          %v378 = vsel %vm341, %v373, %v377
          %379 = vrot.lane.b32.xlu0 %v378, 112
          %v380 = vpop.permute.xlu0 %379
          %v381 = vrot.slane %v380, 4
          %vm382 = vcmask 916480
          %v383 = vsel %vm382, %v381, %v380
          %v386 = vmul.f32 %v334, %v383
          %v387 = vmul.f32 %v335, %v381
          %390 = vst [vmem:[#allocation1] ss:$2 sm:$0xff] %v386
          %s391 = scalar_lea.vmem [#allocation1], 16
          %392 = vst [vmem:[%s391] ss:$2 sm:$0xff] %v387
          %v393 = vld.sshfl [vmem:[#allocation1] sm:$0xff pattern:$0x75316420]
          %v394 = vld.sshfl [vmem:[#allocation1 + $0x8] sm:$0xff pattern:$0x75316420]
          %v395 = vld.sshfl [vmem:[#allocation1 + $0x10] sm:$0xff pattern:$0x75316420]
          %v399 = vpack.c.bf16 %v394, %v393
          %v400 = vpack.c.bf16 %v395, %v395
          %v401 = vperm.slane %v327, 1
          %v402 = vperm.slane %v331, 1
          %v403 = vunpack.c.l.bf16 %v401
          %v404 = vunpack.c.l.bf16 %v402
          %v407 = vrot.slane %v404, 4
          %v408 = vsel %vm341, %v403, %v407
          %409 = vrot.lane.b32.xlu0 %v408, 113
          %v410 = vpop.permute.xlu0 %409
          %v411 = vrot.slane %v410, 4
          %vm412 = vcmask 924672
          %v413 = vsel %vm412, %v411, %v410
          %v416 = vmul.f32 %v334, %v413
          %v417 = vmul.f32 %v335, %v411
          %420 = vst [vmem:[#allocation1] ss:$2 sm:$0xff] %v416
          %s421 = scalar_lea.vmem [#allocation1], 16
          %422 = vst [vmem:[%s421] ss:$2 sm:$0xff] %v417
          %v423 = vld.sshfl [vmem:[#allocation1] sm:$0xff pattern:$0x75316420]
          %v424 = vld.sshfl [vmem:[#allocation1 + $0x8] sm:$0xff pattern:$0x75316420]
          %v425 = vld.sshfl [vmem:[#allocation1 + $0x10] sm:$0xff pattern:$0x75316420]
          %v429 = vpack.c.bf16 %v424, %v423
          %v430 = vpack.c.bf16 %v425, %v425
          %v431 = vperm.slane %v366, 1
          %v432 = vperm.slane %v370, 1
          %v433 = vunpack.c.l.bf16 %v431
          %v434 = vunpack.c.l.bf16 %v432
          %v437 = vrot.slane %v434, 4
          %v438 = vsel %vm341, %v433, %v437
          %439 = vrot.lane.b32.xlu0 %v438, 127
          %v440 = vpop.permute.xlu0 %439
          %v441 = vrot.slane %v440, 4
          %vm442 = vcmask 1039360
          %v443 = vsel %vm442, %v441, %v440
          %v446 = vmul.f32 %v334, %v443
          %v447 = vmul.f32 %v335, %v441
          %450 = vst [vmem:[#allocation1] ss:$2 sm:$0xff] %v446
          %s451 = scalar_lea.vmem [#allocation1], 16
          %452 = vst [vmem:[%s451] ss:$2 sm:$0xff] %v447
          %v453 = vld.sshfl [vmem:[#allocation1] sm:$0xff pattern:$0x75316420]
          %v454 = vld.sshfl [vmem:[#allocation1 + $0x8] sm:$0xff pattern:$0x75316420]
          %v455 = vld.sshfl [vmem:[#allocation1 + $0x10] sm:$0xff pattern:$0x75316420]
          %v459 = vpack.c.bf16 %v454, %v453
          %v460 = vpack.c.bf16 %v455, %v455
          %v461 = vperm.slane %v327, 2
          %v462 = vperm.slane %v331, 2
          %v464 = vrot.slane %v318, 2
          %v466 = vunpack.c.l.bf16 %v464
          %v467 = vunpack.c.l.bf16 %v461
          %v468 = vunpack.c.l.bf16 %v462
          %v471 = vrot.slane %v468, 4
          %v472 = vsel %vm341, %v467, %v471
          %v474 = vmul.f32 %v466, %v472
          %476 = vst [vmem:[#allocation1] ss:$2 sm:$0xff] %v474
          %v477 = vld.sshfl [vmem:[#allocation1] sm:$0xff pattern:$0x75316420]
          %v478 = vld.sshfl [vmem:[#allocation1 + $0x8] sm:$0xff pattern:$0x75316420]
          %v481 = vpack.c.bf16 %v478, %v477
          %v482 = vperm.slane %v366, 2
          %v483 = vperm.slane %v370, 2
          %484 = vrot.lane.b32.xlu0 %v318, 127
          %v485 = vpop.permute.xlu0 %484
          %v486 = vrot.slane %v485, 2
          %v487 = vrot.slane %v485, 4
          %vm488 = vcmask 1039360
          %v489 = vsel %vm488, %v486, %v487
          %v491 = vunpack.c.l.bf16 %v489
          %v492 = vunpack.c.l.bf16 %v482
          %v493 = vunpack.c.l.bf16 %v483
          %v496 = vrot.slane %v493, 4
          %v497 = vsel %vm341, %v492, %v496
          %v499 = vmul.f32 %v491, %v497
          %501 = vst [vmem:[#allocation1] ss:$2 sm:$0xff] %v499
          %v502 = vld.sshfl [vmem:[#allocation1] sm:$0xff pattern:$0x75316420]
          %v503 = vld.sshfl [vmem:[#allocation1 + $0x8] sm:$0xff pattern:$0x75316420]
          %v506 = vpack.c.bf16 %v503, %v502
          %v507 = vperm.slane %v327, 3
          %v508 = vperm.slane %v331, 3
          %509 = vrot.lane.b32.xlu0 %v318, 113
          %v510 = vpop.permute.xlu0 %509
          %v511 = vrot.slane %v510, 2
          %v512 = vrot.slane %v510, 4
          %vm513 = vcmask 924672
          %v514 = vsel %vm513, %v511, %v512
          %v516 = vunpack.c.l.bf16 %v514
          %v517 = vunpack.c.l.bf16 %v507
          %v518 = vunpack.c.l.bf16 %v508
          %v521 = vrot.slane %v518, 4
          %v522 = vsel %vm341, %v517, %v521
          %v524 = vmul.f32 %v516, %v522
          %526 = vst [vmem:[#allocation1] ss:$2 sm:$0xff] %v524
          %v527 = vld.sshfl [vmem:[#allocation1] sm:$0xff pattern:$0x75316420]
          %v528 = vld.sshfl [vmem:[#allocation1 + $0x8] sm:$0xff pattern:$0x75316420]
          %v531 = vpack.c.bf16 %v528, %v527
          %v532 = vperm.slane %v366, 3
          %v533 = vperm.slane %v370, 3
          %534 = vrot.lane.b32.xlu0 %v318, 112
          %v535 = vpop.permute.xlu0 %534
          %v536 = vrot.slane %v535, 2
          %v537 = vrot.slane %v535, 4
          %vm538 = vcmask 916480
          %v539 = vsel %vm538, %v536, %v537
          %v541 = vunpack.c.l.bf16 %v539
          %v542 = vunpack.c.l.bf16 %v532
          %v543 = vunpack.c.l.bf16 %v533
          %v546 = vrot.slane %v543, 4
          %v547 = vsel %vm341, %v542, %v546
          %v549 = vmul.f32 %v541, %v547
          %551 = vst [vmem:[#allocation1] ss:$2 sm:$0xff] %v549
          %v552 = vld.sshfl [vmem:[#allocation1] sm:$0xff pattern:$0x75316420]
          %v553 = vld.sshfl [vmem:[#allocation1 + $0x8] sm:$0xff pattern:$0x75316420]
          %v556 = vpack.c.bf16 %v553, %v552
          %v558 = vunpack.c.l.b16 %v320
          %v559 = vunpack.c.h.b16 %v320
          %v560 = vpack.c.b16 %v558, %v558
          %v561 = vpack.c.b16 %v559, %v559
          %v563 = vpack.i.b16 %v560, %v560
          %v565 = vperm.slane %v563, 0
          %v567 = vpack.i.b16 %v561, %v561
          %v569 = vperm.slane %v567, 0
          %570 = vrot.lane.b32.xlu0 %v318, 111
          %v571 = vpop.permute.xlu0 %570
          %v572 = vrot.slane %v571, 2
          %v573 = vrot.slane %v571, 4
          %vm574 = vcmask 908288
          %v575 = vsel %vm574, %v572, %v573
          %v577 = vunpack.c.l.bf16 %v575
          %v578 = vunpack.c.l.bf16 %v565
          %v579 = vunpack.c.l.bf16 %v569
          %v582 = vrot.slane %v579, 4
          %v583 = vsel %vm341, %v578, %v582
          %v585 = vmul.f32 %v577, %v583
          %587 = vst [vmem:[#allocation1] ss:$2 sm:$0xff] %v585
          %v588 = vld.sshfl [vmem:[#allocation1] sm:$0xff pattern:$0x75316420]
          %v589 = vld.sshfl [vmem:[#allocation1 + $0x8] sm:$0xff pattern:$0x75316420]
          %v592 = vpack.c.bf16 %v589, %v588
          %595 = vrot.lane.b32.xlu0 %v399, 127
          %v596 = vpop.permute.xlu0 %595
          %597 = vrot.lane.b32.xlu0 %v400, 127
          %v598 = vpop.permute.xlu0 %597
          %v599 = vrot.slane %v596, 4
          %v600 = vrot.slane %v598, 4
          %vm601 = vcmask 1043456
          %v602 = vsel %vm601, %v599, %v600
          %v603 = vsel %vm488, %v596, %v602
          %606 = vrot.lane.b32.xlu0 %v429, 126
          %v607 = vpop.permute.xlu0 %606
          %608 = vrot.lane.b32.xlu0 %v430, 126
          %v609 = vpop.permute.xlu0 %608
          %v610 = vrot.slane %v607, 4
          %v611 = vrot.slane %v609, 4
          %v612 = vsel %vm601, %v610, %v611
          %vm613 = vcmask 1031168
          %v614 = vsel %vm613, %v607, %v612
          %617 = vrot.lane.b32.xlu0 %v459, 112
          %v618 = vpop.permute.xlu0 %617
          %619 = vrot.lane.b32.xlu0 %v460, 112
          %v620 = vpop.permute.xlu0 %619
          %v621 = vrot.slane %v618, 4
          %v622 = vrot.slane %v620, 4
          %v623 = vsel %vm601, %v621, %v622
          %v624 = vsel %vm538, %v618, %v623
          %626 = vrot.lane.b32.xlu0 %v481, 111
          %v627 = vpop.permute.xlu0 %626
          %v628 = vrot.slane %v627, 4
          %v629 = vsel %vm574, %v628, %v627
          %631 = vrot.lane.b32.xlu0 %v506, 111
          %v632 = vpop.permute.xlu0 %631
          %v633 = vrot.slane %v632, 4
          %v634 = vsel %vm574, %v633, %v632
          %636 = vrot.lane.b32.xlu0 %v531, 111
          %v637 = vpop.permute.xlu0 %636
          %v638 = vrot.slane %v637, 4
          %v639 = vsel %vm574, %v638, %v637
          %641 = vrot.lane.b32.xlu0 %v556, 111
          %v642 = vpop.permute.xlu0 %641
          %v643 = vrot.slane %v642, 4
          %v644 = vsel %vm574, %v643, %v642
          %646 = vrot.lane.b32.xlu0 %v592, 111
          %v647 = vpop.permute.xlu0 %646
          %v648 = vrot.slane %v647, 4
          %v649 = vsel %vm574, %v648, %v647
          %v652 = vrot.slane %v363, 2
          %v653 = vrot.slane %v364, 4
          %v654 = vrot.slane %v364, 6
          %v655 = vrot.slane %v603, 2
          %v656 = vrot.slane %v598, 6
          %v657 = vrot.slane %v614, 2
          %v658 = vrot.slane %v609, 6
          %v659 = vrot.slane %v624, 2
          %v660 = vrot.slane %v620, 6
          %v661 = vrot.slane %v629, 2
          %v662 = vrot.slane %v628, 4
          %v663 = vrot.slane %v628, 6
          %v664 = vrot.slane %v634, 2
          %v665 = vrot.slane %v633, 4
          %v666 = vrot.slane %v633, 6
          %v667 = vrot.slane %v639, 2
          %v668 = vrot.slane %v638, 4
          %v669 = vrot.slane %v638, 6
          %v670 = vrot.slane %v644, 2
          %v671 = vrot.slane %v643, 4
          %v672 = vrot.slane %v643, 6
          %v673 = vrot.slane %v649, 2
          %v674 = vrot.slane %v648, 4
          %v675 = vrot.slane %v648, 6
          %vm676 = vcmask 1041408
          %v679 = vsel %vm676, %v363, %v652
          %vm680 = vcmask 1045508
          %v683 = vsel %vm680, %v653, %v654
          %v684 = vsel %vm341, %v679, %v683
          %v687 = vsel %vm676, %v603, %v655
          %v690 = vsel %vm680, %v600, %v656
          %v691 = vsel %vm341, %v687, %v690
          %v694 = vsel %vm676, %v614, %v657
          %v697 = vsel %vm680, %v611, %v658
          %v698 = vsel %vm341, %v694, %v697
          %v701 = vsel %vm676, %v624, %v659
          %v704 = vsel %vm680, %v622, %v660
          %v705 = vsel %vm341, %v701, %v704
          %v708 = vsel %vm676, %v629, %v661
          %v711 = vsel %vm680, %v662, %v663
          %v712 = vsel %vm341, %v708, %v711
          %v715 = vsel %vm676, %v634, %v664
          %v718 = vsel %vm680, %v665, %v666
          %v719 = vsel %vm341, %v715, %v718
          %v722 = vsel %vm676, %v639, %v667
          %v725 = vsel %vm680, %v668, %v669
          %v726 = vsel %vm341, %v722, %v725
          %v729 = vsel %vm676, %v644, %v670
          %v732 = vsel %vm680, %v671, %v672
          %v733 = vsel %vm341, %v729, %v732
          %v736 = vsel %vm676, %v649, %v673
          %v739 = vsel %vm680, %v674, %v675
          %v740 = vsel %vm341, %v736, %v739
          %741 = vst [vmem:[#allocation1] ss:$2 sm:$0xff] %v684
          %s742 = scalar_lea.vmem [#allocation1], 1
          %743 = vst [vmem:[%s742] ss:$2 sm:$0xff] %v691
          %s744 = scalar_lea.vmem [#allocation1], 16
          %745 = vst [vmem:[%s744] ss:$2 sm:$0xff] %v698
          %s746 = scalar_lea.vmem [#allocation1], 17
          %747 = vst [vmem:[%s746] ss:$2 sm:$0xff] %v705
          %s748 = scalar_lea.vmem [#allocation1], 32
          %749 = vst [vmem:[%s748] ss:$2 sm:$0xff] %v712
          %s750 = scalar_lea.vmem [#allocation1], 33
          %751 = vst [vmem:[%s750] ss:$2 sm:$0xff] %v719
          %s752 = scalar_lea.vmem [#allocation1], 48
          %753 = vst [vmem:[%s752] ss:$2 sm:$0xff] %v726
          %s754 = scalar_lea.vmem [#allocation1], 49
          %755 = vst [vmem:[%s754] ss:$2 sm:$0xff] %v733
          %v756 = vld.sshfl [vmem:[#allocation1] sm:$0xff pattern:$0x75643120]
          %v758 = vld.sshfl [vmem:[#allocation1 + $0x8] sm:$0xff pattern:$0x75643120]
          %v760 = vld.sshfl [vmem:[#allocation1 + $0x10] sm:$0xff pattern:$0x75643120]
          %v762 = vld.sshfl [vmem:[#allocation1 + $0x18] sm:$0xff pattern:$0x75643120]
          %v764 = vld.sshfl [vmem:[#allocation1 + $0x20] sm:$0xff pattern:$0x75643120]
          %v766 = vld.sshfl [vmem:[#allocation1 + $0x28] sm:$0xff pattern:$0x75643120]
          %v768 = vld.sshfl [vmem:[#allocation1 + $0x30] sm:$0xff pattern:$0x75643120]
          %v770 = vld.sshfl [vmem:[#allocation1 + $0x38] sm:$0xff pattern:$0x75643120]
          %772 = vst [vmem:[#allocation1] ss:$2 sm:$0xff] %v740
          %v773 = vld.sshfl [vmem:[#allocation1] sm:$0xff pattern:$0x75643120]
          %v775 = vld.sshfl [vmem:[#allocation1 + $0x8] sm:$0xff pattern:$0x75643120]
          %777 = vrot.lane.b32.xlu0 %v756, 17
          %v778 = vpop.permute.xlu0 %777
          %779 = vrot.lane.b32.xlu0 %v758, 17
          %v780 = vpop.permute.xlu0 %779
          %781 = vrot.lane.b32.xlu0 %v760, 17
          %v782 = vpop.permute.xlu0 %781
          %783 = vrot.lane.b32.xlu0 %v762, 17
          %v784 = vpop.permute.xlu0 %783
          %785 = vrot.lane.b32.xlu0 %v764, 17
          %v786 = vpop.permute.xlu0 %785
          %787 = vrot.lane.b32.xlu0 %v766, 17
          %v788 = vpop.permute.xlu0 %787
          %789 = vrot.lane.b32.xlu0 %v768, 17
          %v790 = vpop.permute.xlu0 %789
          %791 = vrot.lane.b32.xlu0 %v770, 17
          %v792 = vpop.permute.xlu0 %791
          %793 = vrot.lane.b32.xlu0 %v773, 17
          %v794 = vpop.permute.xlu0 %793
          %795 = vrot.lane.b32.xlu0 %v775, 17
          %v796 = vpop.permute.xlu0 %795
          %v797 = vrot.slane %v778, 4
          %v798 = vrot.slane %v780, 4
          %v799 = vrot.slane %v782, 4
          %v800 = vrot.slane %v784, 4
          %v801 = vrot.slane %v786, 4
          %v802 = vrot.slane %v788, 4
          %v803 = vrot.slane %v790, 4
          %v804 = vrot.slane %v792, 4
          %v805 = vrot.slane %v794, 4
          %v806 = vrot.slane %v796, 4
          %v807 = vsel %vm601, %v797, %v798
          %vm808 = vcmask 138240
          %v809 = vsel %vm808, %v778, %v807
          %v810 = vsel %vm601, %v799, %v800
          %v811 = vsel %vm808, %v782, %v810
          %v812 = vsel %vm601, %v801, %v802
          %v813 = vsel %vm808, %v786, %v812
          %v814 = vsel %vm601, %v803, %v804
          %v815 = vsel %vm808, %v790, %v814
          %v816 = vsel %vm601, %v805, %v806
          %v817 = vsel %vm808, %v794, %v816
          %823 = vst [vmem:[#allocation3] sm:$0xff] %v809
          %824 = vst [vmem:[#allocation3 + $0x8] sm:$0xff] %v811
          %825 = vst [vmem:[#allocation3 + $0x10] sm:$0xff] %v813
          %826 = vst [vmem:[#allocation3 + $0x18] sm:$0xff] %v815
          %827 = vst [vmem:[#allocation3 + $0x20] sm:$0x33] %v817
        $region52: #{tpu_custom_call.1} parent=35 // pred_fallthru
          _
        %v828 = vld [vmem:[#allocation4] sm:$0xf]
        %v829 = vld [vmem:[#allocation3] sm:$0xff]
        %v830 = vld [vmem:[#allocation3 + $0x8] sm:$0xff]
        %v831 = vld [vmem:[#allocation3 + $0x10] sm:$0xff]
        %v832 = vld [vmem:[#allocation3 + $0x18] sm:$0xff]
        %v833 = vld [vmem:[#allocation3 + $0x20] sm:$0x33]
        %v834 = vld [vmem:[%s283] sm:$0xff]
        %836 = vset.pattern.permute.xlu0 0
        %837 = vperm.xlu0 %836, %v834
        %v838 = vpop.permute.xlu0 %837
        %v845 = vunpack.c.l.b16 %v829
        %v846 = vunpack.c.h.b16 %v829
        %v847 = vunpack.c.l.b16 %v830
        %v848 = vunpack.c.h.b16 %v830
        %v849 = vunpack.c.l.b16 %v831
        %v850 = vunpack.c.h.b16 %v831
        %v851 = vunpack.c.l.b16 %v832
        %v852 = vunpack.c.h.b16 %v832
        %v853 = vunpack.c.l.b16 %v833
        %v854 = vunpack.c.h.b16 %v833
        %v855 = vpack.c.b16 %v847, %v845
        %v856 = vpack.c.b16 %v848, %v846
        %v857 = vpack.c.b16 %v851, %v849
        %v858 = vpack.c.b16 %v852, %v850
        %v859 = vpack.c.b16 %v853, %v853
        %v860 = vpack.c.b16 %v854, %v854
        %vm865 = vcmask 293888
        %v867 = vsel %vm865, %v828, 0
        %vm869 = vcmask 1041408
        %v871 = vsel %vm869, %v859, 0
        %v874 = vsel %vm869, %v860, 0
        %876 = vmatpush.bf16.msra.mxu0 0
        %877 = vmatpush.bf16.msra.mxu0 0
        %878 = vmatpush.bf16.msra.mxu0 0
        %879 = vmatpush.bf16.msra.mxu0 0
        %880 = vmatpush.bf16.msra.mxu0 0
        %881 = vmatpush.bf16.msra.mxu0 %v871
        %882 = vmatpush.bf16.msra.mxu0 %v857
        %883 = vmatpush.bf16.msra.mxu0 %v855
        %884 = vmatmul.bf16.gmra.mxu0 %v867
        %v885 = vpop.f32.mrf.mxu0
        %v886 = vadd.f32 %v838, %v885
        %v887 = vpop.f32.mrf.mxu0
        %888 = vdwg.mxu0
        %889 = vmatpush.bf16.msra.mxu0 0
        %890 = vmatpush.bf16.msra.mxu0 0
        %891 = vmatpush.bf16.msra.mxu0 0
        %892 = vmatpush.bf16.msra.mxu0 0
        %893 = vmatpush.bf16.msra.mxu0 0
        %894 = vmatpush.bf16.msra.mxu0 %v874
        %895 = vmatpush.bf16.msra.mxu0 %v858
        %896 = vmatpush.bf16.msra.mxu0 %v856
        %897 = vmatmul.bf16.gmra.mxu0 %v867
        %v898 = vpop.f32.mrf.mxu0
        %v899 = vadd.f32 %v838, %v898
        %v900 = vpop.f32.mrf.mxu0
        %901 = vdwg.mxu0
        %902 = vst [vmem:[%s273] sm:$0xff] %v886
        %903 = vst [vmem:[%s273 + $0x8] sm:$0xff] %v899
        %s904 = sand.u32 %s155, 1
        %s905 = scalar_lea.sflag [#allocation6], %s904
        %s906 = sand.u32 %s155, 1
        %s907 = smul.addr %s906, 16
        %s908 = scalar_lea.vmem [#allocation9], %s907
        // Predicated region
        $region53: #{tpu_custom_call.1} parent=35 // pred_check
          %p909 = pneg %p165
        $region54: #{tpu_custom_call.1} parent=35 // pred_check_branch
          %911 = sbr.rel (%p909) target = $region56
        $region55: #{tpu_custom_call.1} parent=35 // pred_region
          %s912 = smul.u32 2, %s26
          %914 = vsyncadd %s905, 0
          %s915 = smul.addr %s27, 2
          %s916 = sadd.s32 %s912, %s915
          %s917 = smul.addr %s25, 2
          %s918 = sadd.s32 %s916, %s917
          %s919 = smul.addr %s918, 8
          %s920 = scalar_lea.hbm %s4, %s919
          %s922 = sshll.u32 %s908, 4
          %s923 = int_to_ptr.vmem [resolvable:$true] %s922
          %s924 = sshll.u32 %s920, 4
          %s925 = int_to_ptr.hbm [resolvable:$true] %s924
          %927 = dma.vmem_to_hbm [thread:$0]  %s923, 256, %s925, %s905
        $region56: #{tpu_custom_call.1} parent=35 // pred_fallthru
          _
      $region36: #{tpu_custom_call.1} parent=5 // pred_fallthru
        _
      %p928 = scmp.le.s32.totalorder 2, %s15
      // Predicated region
      $region57: #{tpu_custom_call.1} parent=5 // pred_check
        %p929 = pneg %p928
      $region58: #{tpu_custom_call.1} parent=5 // pred_check_branch
        %931 = sbr.rel (%p929) target = $region60
      $region59: #{tpu_custom_call.1} parent=5 // pred_region
        %s932 = ssub.s32 %s15, 2
        // Predicated region
        $region61: #{tpu_custom_call.1} parent=59 // pred_check
          %p933 = pneg %p171
        $region62: #{tpu_custom_call.1} parent=59 // pred_check_branch
          %935 = sbr.rel (%p933) target = $region64
        $region63: #{tpu_custom_call.1} parent=59 // pred_region
          %s936 = sand.u32 %s156, 1
          %s937 = scalar_lea.sflag [#allocation6], %s936
          %s938 = sand.u32 %s156, 1
          %s939 = smul.addr %s938, 16
          %s940 = scalar_lea.vmem [#allocation9], %s939
          %942 = dma.done %s937, 256
        $region64: #{tpu_custom_call.1} parent=59 // pred_fallthru
          _
      $region60: #{tpu_custom_call.1} parent=5 // pred_fallthru
        _
    $region6: #{tpu_custom_call.1} parent=1 // loop_footer
      %s19 = sadd.s32 1, %s15
    $region7: #{tpu_custom_call.1} parent=1 // loop_footer_branch
      %14 = sbr.rel target = $region3
    $region8: #{tpu_custom_call.1} parent=1 // loop_exit
      _
    %943 = vsyncpa [#allocation5], 1
    %s944 = scalar_lea.sflag [#allocation5], 1
    %945 = vsyncpa %s944, 1
    %946 = vsyncpa [#allocation8], 1
    %947 = vsyncpa [#allocation6], 1
    %s948 = scalar_lea.sflag [#allocation6], 1
    %949 = vsyncpa %s948, 1

</llo_original>
